<compile_context>
chip_gen: v6e
topology: v6e:2x2x1
jax: 0.10.0
libtpu: 0.0.40
codegen_flags: <defaults>
</compile_context>

<pallas_src>
import functools
import math

import numpy as np
import jax
import jax.numpy as jnp
from jax.experimental import pallas as pl
from jax.experimental.pallas import tpu as pltpu


def _round_up(x, m):
    return ((x + m - 1) // m) * m


def _cdiv(a, b):
    return -(-a // b)


def _xlogx(x):
    # 0*log(0) -> 0 so label_smoothing in {0, 1} degenerates cleanly (no -inf leaks).
    return float(x) * math.log(x) if x > 0.0 else 0.0


def _unlikelihood_kernel(logits_ref, tgt_ref, focc_ref, out_ref, *,
                         smoothing_value, confidence, kl_const, ignore_index, tm):
    # logits_ref: (tm, V)  logits tile (any float dtype; single f32 upcast below)
    # tgt_ref:    (tm, 1)  int32 target ids (ignore_index for masked / padded rows)
    # focc_ref:   (1, V)   int32 first valid occurrence position per vocab id (sentinel = big)
    # out_ref:    (1,1,2)  per-tile partial sums: [KL, unlikelihood]
    i = pl.program_id(0)
    V = logits_ref.shape[-1]

    tgt = tgt_ref[...]                                             # (tm, 1) int32
    valid = tgt != ignore_index                                    # padded ragged rows are invalid too
    validf = valid.astype(jnp.float32)                             # (tm, 1)

    col = jax.lax.broadcasted_iota(jnp.int32, (1, V), 1)           # (1, V) vocab id per lane
    row = i * tm + jax.lax.broadcasted_iota(jnp.int32, (tm, 1), 0)  # (tm, 1) global row index

    # Single f32 upcast. Zero invalid rows BEFORE exp/log so garbage from the ragged
    # (out-of-bounds) last tile can never poison the reductions with NaN/Inf.
    logits = jnp.where(valid, logits_ref[...].astype(jnp.float32), 0.0)   # (tm, V)

    # Stable softmax pieces — full-tile EUP pass #1 (exp), reused for both loss terms.
    m = jnp.max(logits, axis=-1, keepdims=True)                    # (tm, 1)
    z = logits - m                                                 # (tm, V)
    exp_z = jnp.exp(z)                                             # (tm, V)
    sum_exp = jnp.sum(exp_z, axis=-1, keepdims=True)               # (tm, 1)
    lse = jnp.log(sum_exp)                                         # (tm, 1), cheap

    is_target = col == tgt                                         # (tm, V) bool

    # ---- label-smoothed KL, algebraically collapsed per row:
    #   KL = C - sv * sum_v(logp) - (conf - sv) * logp[target]
    #   sum_v(logp) = sum_v(z) - V * lse ;  logp[target] = z[target] - lse
    sum_z = jnp.sum(z, axis=-1, keepdims=True)                     # (tm, 1)
    z_tgt = jnp.sum(jnp.where(is_target, z, 0.0), axis=-1, keepdims=True)
    sum_logp = sum_z - jnp.float32(V) * lse
    logp_tgt = z_tgt - lse
    kl_row = (jnp.float32(kl_const)
              - jnp.float32(smoothing_value) * sum_logp
              - jnp.float32(confidence - smoothing_value) * logp_tgt)     # (tm, 1)
    kl_part = jnp.sum(kl_row * validf)

    # ---- unlikelihood term: vocab ids seen at an EARLIER valid position, excluding this
    # row's target; padding column already excluded via the first-occurrence table sentinel.
    seen_before = focc_ref[...] < row                              # (1,V) vs (tm,1) -> (tm,V)
    negf = (seen_before & jnp.logical_not(is_target) & valid).astype(jnp.float32)
    p = exp_z * (1.0 / sum_exp)                                    # softmax prob, no 2nd full-tile exp
    one_minus_p = jnp.maximum(1.0 - p, jnp.float32(1e-5))          # matches the reference clamp
    cu_part = -jnp.sum(jnp.log(one_minus_p) * negf)                # full-tile EUP pass #2 (last)

    lane = jax.lax.broadcasted_iota(jnp.int32, (1, 1, 2), 2)
    out_ref[...] = jnp.where(lane == 0, kl_part, cu_part).astype(out_ref.dtype)


def unlikelihood_loss(output, target, *, label_smoothing=0.1, ignore_index=-1,
                      padding_idx=0, tm=256):
    """output: (N, V) logits (f32 or bf16), target: (N,) int ids in [-1, V-1] (-1 ignored)."""
    N, V = output.shape
    smoothing_value = label_smoothing / (V - 1)
    confidence = 1.0 - label_smoothing
    kl_const = _xlogx(confidence) + (V - 1) * _xlogx(smoothing_value)

    # ---- generation-aware tile-size selection: big row tiles, bounded by real VMEM ----
    try:
        vmem_cap = int(pltpu.get_tpu_info().vmem_capacity_bytes)
    except Exception:
        vmem_cap = 64 << 20                                        # conservative (v7x per-TC)
    vmem_limit = min((vmem_cap * 3) // 4, 96 << 20)                # never claim all physical VMEM
    in_itemsize = jnp.dtype(output.dtype).itemsize                 # bf16 inputs halve the HBM stream
    bytes_per_row = 2 * V * in_itemsize + 6 * V * 4                # 2x-buffered input + f32 temporaries
    max_tm_vmem = max(8, ((vmem_limit // 2) // bytes_per_row) // 8 * 8)

    tm = min(tm, max_tm_vmem, _round_up(N, 8))
    if N >= 16:
        tm = min(tm, _round_up((N + 1) // 2, 8))                   # >=2 row tiles for v7x megacore
    tm = max(8, (tm // 8) * 8)
    grid = _cdiv(N, tm)
    n_pad = grid * tm

    target = target.astype(jnp.int32)

    # First valid occurrence position per vocab id (O(N) scatter-min); padding column excluded here
    # so the kernel needs neither a padding compare nor a padding mask.
    pos = jnp.arange(N, dtype=jnp.int32)
    valid = target != ignore_index
    idx = jnp.where(valid, target, 0)
    vals = jnp.where(valid, pos, jnp.int32(n_pad))                 # sentinel "never seen"
    first_occ = jnp.full((V,), n_pad, jnp.int32).at[idx].min(vals)
    first_occ = first_occ.at[padding_idx].set(n_pad).reshape(1, V)

    # Only the tiny target vector is padded; logits are consumed unpadded (the ragged last
    # tile is masked in-kernel), avoiding a full HBM copy of the N x V array.
    tgt_col = jnp.pad(target, (0, n_pad - N), constant_values=ignore_index).reshape(n_pad, 1)

    kernel = functools.partial(
        _unlikelihood_kernel,
        smoothing_value=float(smoothing_value), confidence=float(confidence),
        kl_const=float(kl_const), ignore_index=int(ignore_index), tm=tm)

    parts = pl.pallas_call(
        kernel,
        out_shape=jax.ShapeDtypeStruct((grid, 1, 2), jnp.float32),
        grid_spec=pltpu.PrefetchScalarGridSpec(
            num_scalar_prefetch=0,
            grid=(grid,),
            in_specs=[
                pl.BlockSpec((tm, V), lambda i: (i, 0)),   # logits tile (ragged last tile OK)
                pl.BlockSpec((tm, 1), lambda i: (i, 0)),   # targets column
                pl.BlockSpec((1, V), lambda i: (0, 0)),    # first-occurrence table (resident)
            ],
            out_specs=pl.BlockSpec((1, 1, 2), lambda i: (i, 0, 0)),
        ),
        compiler_params=pltpu.CompilerParams(
            dimension_semantics=("parallel",),
            vmem_limit_bytes=int(vmem_limit),
        ),
    )(output, tgt_col, first_occ)

    kl = jnp.sum(parts[:, 0, 0])
    cu = jnp.sum(parts[:, 0, 1])
    # norm is a trivial O(N) reduce — done in the wrapper (XLA fuses it for free).
    norm = jnp.sum(((target != ignore_index) & (target != padding_idx)).astype(jnp.float32))
    return (kl + 0.1 * cu) / norm


def _reference_numpy(output, target, *, label_smoothing, ignore_index, padding_idx):
    """Direct numpy transcription of the PyTorch UnlikelihoodLoss.forward."""
    lg = np.asarray(output, np.float64)
    tg = np.asarray(target)
    V = lg.shape[1]
    valid = tg != ignore_index
    t = tg[valid]
    o = lg[valid]
    o = o - o.max(-1, keepdims=True)
    o = o - np.log(np.exp(o).sum(-1, keepdims=True))               # log_softmax
    n = t.shape[0]
    sm = label_smoothing / (V - 1)
    conf = 1.0 - label_smoothing
    mp = np.full((n, V), sm)
    mp[np.arange(n), t] = conf
    kl = np.sum(mp * (np.log(mp) - o))
    ctx = np.tile(t[None, :], (n, 1))
    ctx_ = np.tril(ctx, -1) + padding_idx
    ctx_ = ctx_ * np.triu(ctx_)
    ctx = np.tril(ctx, -1) + ctx_
    ctx = np.where(ctx == t[:, None], padding_idx, ctx)
    neg = np.zeros((n, V))
    neg[np.arange(n)[:, None], ctx] = 1.0
    neg[:, padding_idx] = 0.0
    omp = np.clip(1.0 - np.exp(o), 1e-5, None)
    custom = np.sum(-np.log(omp) * neg)
    norm = float((t != padding_idx).sum())
    return kl / norm + 0.1 * custom / norm


if __name__ == "__main__":
    # Small config: N = 35 flat target positions (deliberately NOT a multiple of the row tile,
    # to exercise the ragged-last-tile masking and a 2-tile parallel grid), vocab V = 512.
    N, V = 35, 512
    label_smoothing, ignore_index, padding_idx = 0.1, -1, 0

    key = jax.random.PRNGKey(0)
    k1, k2 = jax.random.split(key)
    logits = jax.random.normal(k1, (N, V), dtype=jnp.float32)
    target = jax.random.randint(k2, (N,), 1, V, dtype=jnp.int32)
    # deterministic repeats (exercise the unlikelihood term) + padding / ignored positions
    target = target.at[5].set(target[2])
    target = target.at[9].set(target[2])
    target = target.at[20].set(target[11])
    target = target.at[30].set(target[11])
    target = target.at[3].set(padding_idx)      # padding token (excluded from norm)
    target = target.at[7].set(ignore_index)     # ignored positions interleaved with repeats
    target = target.at[25].set(ignore_index)

    loss = unlikelihood_loss(logits, target, label_smoothing=label_smoothing,
                             ignore_index=ignore_index, padding_idx=padding_idx)
    jax.block_until_ready(loss)

    ref = _reference_numpy(np.asarray(logits), np.asarray(target),
                           label_smoothing=label_smoothing,
                           ignore_index=ignore_index, padding_idx=padding_idx)
    assert abs(float(loss) - ref) <= 1e-3 + 1e-4 * abs(ref), (float(loss), ref)

    print("KERNEL_OK")
</pallas_src>

<mosaic_0001>
module attributes {stable_mosaic.version = 11 : i64} {
  func.func @_unlikelihood_kernel(%arg0: i32, %arg1: memref<24x512xf32, #tpu.memory_space<vmem>>, %arg2: memref<24x1xi32, #tpu.memory_space<vmem>>, %arg3: memref<1x512xi32, #tpu.memory_space<vmem>>, %arg4: memref<1x1x2xf32, #tpu.memory_space<vmem>>) attributes {dimension_semantics = [#tpu.dimension_semantics<parallel>], iteration_bounds = array<i64: 2>, scalar_prefetch = 0 : i64, scratch_operands = 0 : i64, tpu.core_type = #tpu.core_type<tc>, window_params = [{transform_indices = @transform_0, window_bounds = array<i64: 24, 512>}, {transform_indices = @transform_1, window_bounds = array<i64: 24, 1>}, {pipeline_mode = #tpu.pipeline_mode<synchronous>, transform_indices = @transform_2, window_bounds = array<i64: 1, 512>}, {transform_indices = @transform_3, window_bounds = array<i64: 1, 1, 2>}]} {
    %c0 = arith.constant 0 : index
    %c0_0 = arith.constant 0 : index
    %0 = vector.load %arg2[%c0, %c0_0] : memref<24x1xi32, #tpu.memory_space<vmem>>, vector<24x1xi32>
    %c-1_i32 = arith.constant -1 : i32
    %1 = vector.broadcast %c-1_i32 : i32 to vector<24x1xi32>
    %2 = arith.cmpi ne, %0, %1 : vector<24x1xi32>
    %3 = arith.extui %2 : vector<24x1xi1> to vector<24x1xi32>
    %4 = arith.sitofp %3 : vector<24x1xi32> to vector<24x1xf32>
    %5 = tpu.iota {dimensions = array<i32: 1>} : vector<1x512xi32>
    %c24_i32 = arith.constant 24 : i32
    %6 = arith.muli %arg0, %c24_i32 : i32
    %7 = tpu.iota {dimensions = array<i32: 0>} : vector<24x1xi32>
    %8 = vector.broadcast %6 : i32 to vector<24x1xi32>
    %9 = arith.addi %8, %7 : vector<24x1xi32>
    %c0_1 = arith.constant 0 : index
    %c0_2 = arith.constant 0 : index
    %10 = vector.load %arg1[%c0_1, %c0_2] : memref<24x512xf32, #tpu.memory_space<vmem>>, vector<24x512xf32>
    %cst = arith.constant 0.000000e+00 : f32
    %11 = vector.shape_cast %2 : vector<24x1xi1> to vector<24x1xi1>
    %12 = vector.broadcast %11 : vector<24x1xi1> to vector<24x512xi1>
    %13 = vector.broadcast %cst : f32 to vector<24x512xf32>
    %14 = arith.select %12, %10, %13 : vector<24x512xi1>, vector<24x512xf32>
    %cst_3 = arith.constant dense<0xFF800000> : vector<24xf32>
    %15 = vector.multi_reduction <maximumf>, %14, %cst_3 [1] : vector<24x512xf32> to vector<24xf32>
    %16 = vector.shape_cast %15 : vector<24xf32> to vector<24x1xf32>
    %17 = vector.broadcast %16 : vector<24x1xf32> to vector<24x512xf32>
    %18 = arith.subf %14, %17 : vector<24x512xf32>
    %19 = math.exp %18 : vector<24x512xf32>
    %cst_4 = arith.constant dense<0.000000e+00> : vector<24xf32>
    %20 = vector.multi_reduction <add>, %19, %cst_4 [1] : vector<24x512xf32> to vector<24xf32>
    %21 = vector.shape_cast %20 : vector<24xf32> to vector<24x1xf32>
    %22 = math.log %21 : vector<24x1xf32>
    %23 = vector.broadcast %5 : vector<1x512xi32> to vector<24x512xi32>
    %24 = vector.broadcast %0 : vector<24x1xi32> to vector<24x512xi32>
    %25 = arith.cmpi eq, %23, %24 : vector<24x512xi32>
    %cst_5 = arith.constant dense<0.000000e+00> : vector<24xf32>
    %26 = vector.multi_reduction <add>, %18, %cst_5 [1] : vector<24x512xf32> to vector<24xf32>
    %27 = vector.shape_cast %26 : vector<24xf32> to vector<24x1xf32>
    %cst_6 = arith.constant 0.000000e+00 : f32
    %28 = vector.broadcast %cst_6 : f32 to vector<24x512xf32>
    %29 = arith.select %25, %18, %28 : vector<24x512xi1>, vector<24x512xf32>
    %cst_7 = arith.constant dense<0.000000e+00> : vector<24xf32>
    %30 = vector.multi_reduction <add>, %29, %cst_7 [1] : vector<24x512xf32> to vector<24xf32>
    %31 = vector.shape_cast %30 : vector<24xf32> to vector<24x1xf32>
    %cst_8 = arith.constant 5.120000e+02 : f32
    %32 = vector.broadcast %cst_8 : f32 to vector<24x1xf32>
    %33 = arith.mulf %32, %22 : vector<24x1xf32>
    %34 = arith.subf %27, %33 : vector<24x1xf32>
    %35 = arith.subf %31, %22 : vector<24x1xf32>
    %cst_9 = arith.constant 1.95694724E-4 : f32
    %36 = vector.broadcast %cst_9 : f32 to vector<24x1xf32>
    %37 = arith.mulf %36, %34 : vector<24x1xf32>
    %cst_10 = arith.constant -0.948719918 : f32
    %38 = vector.broadcast %cst_10 : f32 to vector<24x1xf32>
    %39 = arith.subf %38, %37 : vector<24x1xf32>
    %cst_11 = arith.constant 0.899804294 : f32
    %40 = vector.broadcast %cst_11 : f32 to vector<24x1xf32>
    %41 = arith.mulf %40, %35 : vector<24x1xf32>
    %42 = arith.subf %39, %41 : vector<24x1xf32>
    %43 = arith.mulf %42, %4 : vector<24x1xf32>
    %44 = vector.shape_cast %43 : vector<24x1xf32> to vector<1x24x1xf32>
    %cst_12 = arith.constant dense<0.000000e+00> : vector<1xf32>
    %45 = vector.multi_reduction <add>, %44, %cst_12 [1, 2] : vector<1x24x1xf32> to vector<1xf32>
    %46 = vector.shape_cast %45 : vector<1xf32> to vector<1x1x1xf32>
    %47 = vector.extract %46[0, 0, 0] : f32 from vector<1x1x1xf32>
    %c0_13 = arith.constant 0 : index
    %c0_14 = arith.constant 0 : index
    %48 = vector.load %arg3[%c0_13, %c0_14] : memref<1x512xi32, #tpu.memory_space<vmem>>, vector<1x512xi32>
    %49 = vector.broadcast %48 : vector<1x512xi32> to vector<24x512xi32>
    %50 = vector.broadcast %9 : vector<24x1xi32> to vector<24x512xi32>
    %51 = arith.cmpi slt, %49, %50 : vector<24x512xi32>
    %cst_15 = arith.constant dense<true> : vector<24x512xi1>
    %52 = arith.xori %25, %cst_15 : vector<24x512xi1>
    %53 = arith.andi %51, %52 : vector<24x512xi1>
    %54 = vector.broadcast %2 : vector<24x1xi1> to vector<24x512xi1>
    %55 = arith.andi %53, %54 : vector<24x512xi1>
    %56 = arith.extui %55 : vector<24x512xi1> to vector<24x512xi32>
    %57 = arith.sitofp %56 : vector<24x512xi32> to vector<24x512xf32>
    %cst_16 = arith.constant 1.000000e+00 : f32
    %58 = vector.broadcast %cst_16 : f32 to vector<24x1xf32>
    %59 = arith.divf %58, %21 : vector<24x1xf32>
    %60 = vector.broadcast %59 : vector<24x1xf32> to vector<24x512xf32>
    %61 = arith.mulf %19, %60 : vector<24x512xf32>
    %cst_17 = arith.constant 1.000000e+00 : f32
    %62 = vector.broadcast %cst_17 : f32 to vector<24x512xf32>
    %63 = arith.subf %62, %61 : vector<24x512xf32>
    %cst_18 = arith.constant 9.99999974E-6 : f32
    %64 = vector.broadcast %cst_18 : f32 to vector<24x512xf32>
    %65 = arith.maximumf %63, %64 : vector<24x512xf32>
    %66 = math.log %65 : vector<24x512xf32>
    %67 = arith.mulf %66, %57 : vector<24x512xf32>
    %68 = vector.shape_cast %67 : vector<24x512xf32> to vector<1x24x512xf32>
    %cst_19 = arith.constant dense<0.000000e+00> : vector<1xf32>
    %69 = vector.multi_reduction <add>, %68, %cst_19 [1, 2] : vector<1x24x512xf32> to vector<1xf32>
    %70 = vector.shape_cast %69 : vector<1xf32> to vector<1x1x1xf32>
    %71 = vector.extract %70[0, 0, 0] : f32 from vector<1x1x1xf32>
    %cst_20 = arith.constant 0.000000e+00 : f32
    %72 = arith.subf %cst_20, %71 : f32
    %73 = tpu.iota {dimensions = array<i32: 2>} : vector<1x1x2xi32>
    %c0_i32 = arith.constant 0 : i32
    %74 = vector.broadcast %c0_i32 : i32 to vector<1x1x2xi32>
    %75 = arith.cmpi eq, %73, %74 : vector<1x1x2xi32>
    %76 = vector.broadcast %47 : f32 to vector<1x1x2xf32>
    %77 = vector.broadcast %72 : f32 to vector<1x1x2xf32>
    %78 = arith.select %75, %76, %77 : vector<1x1x2xi1>, vector<1x1x2xf32>
    %c0_21 = arith.constant 0 : index
    %c0_22 = arith.constant 0 : index
    %c0_23 = arith.constant 0 : index
    %79 = vector.load %arg4[%c0_21, %c0_22, %c0_23] : memref<1x1x2xf32, #tpu.memory_space<vmem>>, vector<1x1x2xf32>
    tpu.vector_store %arg4[%c0_21, %c0_22, %c0_23], %78 {strides = array<i32>} : memref<1x1x2xf32, #tpu.memory_space<vmem>>, vector<1x1x2xf32>,
    return
  }
  func.func @transform_0(%arg0: i32) -> (i32, i32) {
    %c0_i32 = arith.constant 0 : i32
    %c0_i32_0 = arith.constant 0 : i32
    return %arg0, %c0_i32 : i32, i32
  }
  func.func @transform_1(%arg0: i32) -> (i32, i32) {
    %c0_i32 = arith.constant 0 : i32
    %c0_i32_0 = arith.constant 0 : i32
    return %arg0, %c0_i32 : i32, i32
  }
  func.func @transform_2(%arg0: i32) -> (i32, i32) {
    %c0_i32 = arith.constant 0 : i32
    %c0_i32_0 = arith.constant 0 : i32
    %c0_i32_1 = arith.constant 0 : i32
    return %c0_i32, %c0_i32_0 : i32, i32
  }
  func.func @transform_3(%arg0: i32) -> (i32, i32, i32) {
    %c0_i32 = arith.constant 0 : i32
    %c0_i32_0 = arith.constant 0 : i32
    %c0_i32_1 = arith.constant 0 : i32
    return %arg0, %c0_i32, %c0_i32_0 : i32, i32, i32
  }
}

</mosaic_0001>

<llo_original>
// kernel: tpu_custom_call.1
$region0: #{tpu_custom_call.1}
  #allocation0 [shape = 'u32[]', space=smem, size = 0x4, offset = 0x4, fixed_abs, tag = 'smem constant byte address 0x4 - core index']
  #allocation1 [shape = 'u32[144,128]{1,0:T(1,128)}', space=vmem, size = 0x12000, scoped, tag = 'internal scratch']
  %s0 = inlined_call_operand.hbm [shape: f32[35,512], index: 0, kind: input, shape index: {}]
  %s1 = inlined_call_operand.vmem [shape: s32[48,1], index: 1, kind: input, shape index: {}]
  %s2 = inlined_call_operand.vmem [shape: s32[1,512], index: 2, kind: input, shape index: {}]
  %s3 = inlined_call_operand.hbm [shape: f32[2,1,2], index: 3, kind: output, shape index: {}]
  %s4 = sld [smem:[#allocation0]]
  $region49: #{tpu_custom_call.1} parent=0
    _
  %s6 = ssub.s32 1, %s4
  %s7 = scalar_select 0, %s6, %s4
  $region1: #{tpu_custom_call.1} parent=0
    #allocation2 [shape = 'u8[98304]{0}', space=vmem, size = 0x18000, scoped, tag = 'input window, operand 0']
    #allocation3 [shape = 's32[2]{0}', space=sflag, size = 0x8, scoped, tag = 'scoped memory for tpu_custom_call.1']
    #allocation4 [shape = 's32[2]{0}', space=sflag, size = 0x8, scoped, tag = 'scoped memory for tpu_custom_call.1']
    #allocation5 [shape = 'u8[1024]{0}', space=vmem, size = 0x400, scoped, tag = 'output window, operand 0']
    %8 = vsyncpa [#allocation3], 0
    %s9 = scalar_lea.sflag [#allocation3], 1
    %10 = vsyncpa %s9, 0
    %11 = vsyncpa [#allocation4], 0
    %s12 = scalar_lea.sflag [#allocation4], 1
    %13 = vsyncpa %s12, 0
    loop: start=0, step=1, limit=4
    $region2: #{tpu_custom_call.1} parent=1 // loop_pre_header
      _
    $region3: #{tpu_custom_call.1} parent=1 // loop_header
      %s15 = sphi 0, %s19
      %p16 = scmp.ge.s32.totalorder %s15, 4
      %s25 = sphi 0, %s27
      %s28 = sphi 0, %s25
      %s29 = sphi 0, %s28
      %s45 = sphi 0, %s29
      %s51 = sphi 0, %s53
      %s54 = sphi 0, %s51
      %s55 = sphi 0, %s54
      %s71 = sphi 0, %s55
      %s75 = sphi 0, %s75
      %s77 = sphi 0, %s75
      %s78 = sphi 0, %s77
      %s92 = sphi 0, %s78
      %s98 = sphi 0, %s100
      %s101 = sphi 0, %s98
      %s102 = sphi 0, %s101
      %s118 = sphi 0, %s102
    $region4: #{tpu_custom_call.1} parent=1 // loop_header_branch
      %18 = sbr.rel (%p16) target = $region8
    $region5: #{tpu_custom_call.1} parent=1 // loop_body
      %s20 = ssub.s32 %s15, 1
      %s21 = ssub.s32 %s15, 2
      %s22 = sadd.s32 %s15, 1
      %s23 = ssub.s32 %s15, %s22
      %p24 = scmp.eq.s32.totalorder %s23, 0
      %s26 = sadd.s32 %s25, 1
      %s27 = scalar_select %p24, %s25, %s26
      %p30 = pneg %p24
      %p31 = scmp.eq.s32.totalorder %s15, 1
      %p32 = por %p30, %p31
      %p33 = scmp.ne.s32.totalorder %s25, %s28
      %p34 = scmp.eq.s32.totalorder %s15, 0
      %p35 = por %p33, %p34
      %p36 = scmp.ne.s32.totalorder %s25, %s28
      %p37 = scmp.eq.s32.totalorder %s20, 1
      %p38 = por %p36, %p37
      %p39 = scmp.ne.s32.totalorder %s28, %s29
      %p40 = scmp.eq.s32.totalorder %s20, 0
      %p41 = por %p39, %p40
      %p42 = scmp.ne.s32.totalorder %s28, %s29
      %p43 = scmp.eq.s32.totalorder %s21, 1
      %p44 = por %p42, %p43
      %p46 = scmp.ne.s32.totalorder %s29, %s45
      %p47 = scmp.eq.s32.totalorder %s21, 0
      %p48 = por %p46, %p47
      %s49 = ssub.s32 %s15, %s22
      %p50 = scmp.eq.s32.totalorder %s49, 0
      %s52 = sadd.s32 %s51, 1
      %s53 = scalar_select %p50, %s51, %s52
      %p56 = pneg %p50
      %p57 = scmp.eq.s32.totalorder %s15, 1
      %p58 = por %p56, %p57
      %p59 = scmp.ne.s32.totalorder %s51, %s54
      %p60 = scmp.eq.s32.totalorder %s15, 0
      %p61 = por %p59, %p60
      %p62 = scmp.ne.s32.totalorder %s51, %s54
      %p63 = scmp.eq.s32.totalorder %s20, 1
      %p64 = por %p62, %p63
      %p65 = scmp.ne.s32.totalorder %s54, %s55
      %p66 = scmp.eq.s32.totalorder %s20, 0
      %p67 = por %p65, %p66
      %p68 = scmp.ne.s32.totalorder %s54, %s55
      %p69 = scmp.eq.s32.totalorder %s21, 1
      %p70 = por %p68, %p69
      %p72 = scmp.ne.s32.totalorder %s55, %s71
      %p73 = scmp.eq.s32.totalorder %s21, 0
      %p74 = por %p72, %p73
      %s76 = sadd.s32 %s75, 1
      %p79 = scmp.eq.s32.totalorder %s15, 1
      %p80 = scmp.ne.s32.totalorder %s75, %s77
      %p81 = scmp.eq.s32.totalorder %s15, 0
      %p82 = por %p80, %p81
      %p83 = scmp.ne.s32.totalorder %s75, %s77
      %p84 = scmp.eq.s32.totalorder %s20, 1
      %p85 = por %p83, %p84
      %p86 = scmp.ne.s32.totalorder %s77, %s78
      %p87 = scmp.eq.s32.totalorder %s20, 0
      %p88 = por %p86, %p87
      %p89 = scmp.ne.s32.totalorder %s77, %s78
      %p90 = scmp.eq.s32.totalorder %s21, 1
      %p91 = por %p89, %p90
      %p93 = scmp.ne.s32.totalorder %s78, %s92
      %p94 = scmp.eq.s32.totalorder %s21, 0
      %p95 = por %p93, %p94
      %s96 = ssub.s32 %s15, %s22
      %p97 = scmp.eq.s32.totalorder %s96, 0
      %s99 = sadd.s32 %s98, 1
      %s100 = scalar_select %p97, %s98, %s99
      %p103 = pneg %p97
      %p104 = scmp.eq.s32.totalorder %s15, 1
      %p105 = por %p103, %p104
      %p106 = scmp.ne.s32.totalorder %s98, %s101
      %p107 = scmp.eq.s32.totalorder %s15, 0
      %p108 = por %p106, %p107
      %p109 = scmp.ne.s32.totalorder %s98, %s101
      %p110 = scmp.eq.s32.totalorder %s20, 1
      %p111 = por %p109, %p110
      %p112 = scmp.ne.s32.totalorder %s101, %s102
      %p113 = scmp.eq.s32.totalorder %s20, 0
      %p114 = por %p112, %p113
      %p115 = scmp.ne.s32.totalorder %s101, %s102
      %p116 = scmp.eq.s32.totalorder %s21, 1
      %p117 = por %p115, %p116
      %p119 = scmp.ne.s32.totalorder %s102, %s118
      %p120 = scmp.eq.s32.totalorder %s21, 0
      %p121 = por %p119, %p120
      %p122 = scmp.le.s32.totalorder 1, %s15
      %p123 = scmp.lt.s32.totalorder %s15, 3
      %p124 = pnand %p122, %p123
      %p125 = pneg %p124
      // Predicated region
      $region9: #{tpu_custom_call.1} parent=5 // pred_check
        _
      $region10: #{tpu_custom_call.1} parent=5 // pred_check_branch
        %127 = sbr.rel (%p124) target = $region12
      $region11: #{tpu_custom_call.1} parent=5 // pred_region
        %s128 = ssub.s32 %s15, 1
        // Predicated region
        $region13: #{tpu_custom_call.1} parent=11 // pred_check
          %p129 = pneg %p88
        $region14: #{tpu_custom_call.1} parent=11 // pred_check_branch
          %131 = sbr.rel (%p129) target = $region16
        $region15: #{tpu_custom_call.1} parent=11 // pred_region
          _
        $region16: #{tpu_custom_call.1} parent=11 // pred_fallthru
          _
      $region12: #{tpu_custom_call.1} parent=5 // pred_fallthru
        _
      %p132 = scmp.lt.s32.totalorder %s15, 2
      // Predicated region
      $region17: #{tpu_custom_call.1} parent=5 // pred_check
        %p133 = pneg %p132
      $region18: #{tpu_custom_call.1} parent=5 // pred_check_branch
        %135 = sbr.rel (%p133) target = $region20
      $region19: #{tpu_custom_call.1} parent=5 // pred_region
        // Predicated region
        $region21: #{tpu_custom_call.1} parent=19 // pred_check
          %p136 = pneg %p35
        $region22: #{tpu_custom_call.1} parent=19 // pred_check_branch
          %138 = sbr.rel (%p136) target = $region24
        $region23: #{tpu_custom_call.1} parent=19 // pred_region
          %s139 = sand.u32 %s25, 1
          %s140 = scalar_lea.sflag [#allocation3], %s139
          %s141 = sand.u32 %s25, 1
          %s142 = smul.addr %s141, 96
          %s143 = scalar_lea.vmem [#allocation2], %s142
          %s144 = smul.u32 3, %s15
          %s145 = ssub.s32 5, %s144
          %p146 = scmp.lt.s32.totalorder %s145, 3
          %s147 = scalar_select %p146, %s145, 3
          %s148 = smul.u32 128, %s147
          %s149 = smul.u32 %s148, 4
          %s151 = ssub.s32 1536, %s149
          %152 = vsyncadd %s140, %s151
          %p153 = scmp.ne.s32.totalorder 0, %s149
          %s154 = smul.addr %s144, 4
          %s155 = smul.addr %s154, 128
          %s156 = scalar_lea.hbm %s0, %s155
          %s157 = smul.u32 32, %s147
          %s158 = sshll.u32 %s143, 4
          %s159 = int_to_ptr.vmem [resolvable:$true] %s158
          %s160 = sshll.u32 %s157, 4
          %164 = dma.hbm_to_vmem [thread:$0]  (%p153), %s156, %s160, %s159, %s140, 512, 512, 32
        $region24: #{tpu_custom_call.1} parent=19 // pred_fallthru
          _
        // Predicated region
        $region25: #{tpu_custom_call.1} parent=19 // pred_check
          %p165 = pneg %p61
        $region26: #{tpu_custom_call.1} parent=19 // pred_check_branch
          %167 = sbr.rel (%p165) target = $region28
        $region27: #{tpu_custom_call.1} parent=19 // pred_region
          %s168 = smul.u32 3, %s15
          %p169 = scmp.lt.s32.totalorder %s168, 5
          %s170 = scalar_select %p169, %s168, 5
          %s171 = smul.addr %s170, 8
          %s172 = scalar_lea.vmem %s1, %s171
          %s173 = smul.u32 3, %s15
        $region28: #{tpu_custom_call.1} parent=19 // pred_fallthru
          _
      $region20: #{tpu_custom_call.1} parent=5 // pred_fallthru
        _
      %p174 = scmp.le.s32.totalorder 1, %s15
      %p175 = scmp.lt.s32.totalorder %s15, 3
      %p176 = pnand %p174, %p175
      %p177 = pneg %p176
      // Predicated region
      $region29: #{tpu_custom_call.1} parent=5 // pred_check
        _
      $region30: #{tpu_custom_call.1} parent=5 // pred_check_branch
        %179 = sbr.rel (%p176) target = $region32
      $region31: #{tpu_custom_call.1} parent=5 // pred_region
        %s180 = ssub.s32 %s15, 1
        %s181 = sand.u32 %s28, 1
        %s182 = scalar_lea.sflag [#allocation3], %s181
        %s183 = sand.u32 %s28, 1
        %s184 = smul.addr %s183, 96
        %s185 = scalar_lea.vmem [#allocation2], %s184
        // Predicated region
        $region33: #{tpu_custom_call.1} parent=31 // pred_check
          %p186 = pneg %p41
        $region34: #{tpu_custom_call.1} parent=31 // pred_check_branch
          %188 = sbr.rel (%p186) target = $region36
        $region35: #{tpu_custom_call.1} parent=31 // pred_region
          %189 = dma.done %s182, 1536
        $region36: #{tpu_custom_call.1} parent=31 // pred_fallthru
          _
        %s190 = sand.u32 %s28, 1
        %s191 = scalar_lea.sflag [#allocation3], %s190
        %s192 = sand.u32 %s28, 1
        %s193 = smul.addr %s192, 96
        %s194 = scalar_lea.vmem [#allocation2], %s193
        %p195 = pneg %p41
        %p196 = pneg %p38
        %s197 = smul.u32 3, %s20
        %p198 = scmp.lt.s32.totalorder %s197, 5
        %s199 = scalar_select %p198, %s197, 5
        %s200 = smul.addr %s199, 8
        %s201 = scalar_lea.vmem %s1, %s200
        %p202 = pneg %p67
        %p203 = pneg %p64
        %p204 = pneg %p88
        %p205 = pneg %p85
        %p206 = pneg %p114
        %p207 = pneg %p111
        %s208 = sand.u32 %s101, 1
        %s209 = scalar_lea.sflag [#allocation4], %s208
        %s210 = sand.u32 %s101, 1
        %s211 = scalar_lea.vmem [#allocation5], %s210
        %s212 = smul.u32 3, %s20
        %s213 = ssub.s32 5, %s212
        %p214 = scmp.lt.s32.totalorder %s213, 3
        %s215 = scalar_select %p214, %s213, 3
        %s216 = smul.u32 128, %s215
        %s217 = smul.u32 %s216, 4
        %s218 = smul.u32 3, %s20
        %p219 = scmp.lt.s32.totalorder %s218, 5
        %s220 = scalar_select %p219, %s218, 5
        %s221 = smul.addr %s220, 8
        %s222 = scalar_lea.vmem %s1, %s221
        %s223 = smul.u32 3, %s20
        %v224 = vld [vmem:[%s222] sm:$0xff]
        %v225 = vld [vmem:[%s222 + $0x8] sm:$0xff]
        %v226 = vld [vmem:[%s222 + $0x10] sm:$0xff]
        %vm227 = vcmp.ne.s32.totalorder %v224, 4294967295
        %vm228 = vcmp.ne.s32.totalorder %v225, 4294967295
        %vm229 = vcmp.ne.s32.totalorder %v226, 4294967295
        %v230 = vsel %vm227, 1, 0
        %v231 = vsel %vm228, 1, 0
        %v232 = vsel %vm229, 1, 0
        %v233 = vcvt.s32.f32 %v230
        %v234 = vcvt.s32.f32 %v231
        %v235 = vcvt.s32.f32 %v232
        %v236 = vlaneseq
        %v237 = vand.u32 %v236, 127
        %v238 = vadd.s32 %v237, 128
        %v239 = vadd.s32 %v237, 256
        %v240 = vadd.s32 %v237, 384
        %s241 = smul.u32 %s20, 24
        %v242 = vlaneseq
        %v243 = vshrl.u32 %v242, 7
        %v244 = vadd.s32 %v243, 8
        %v245 = vadd.s32 %v243, 16
        %v246 = vstv %s241
        %v247 = vadd.s32 %v246, %v243
        %v248 = vadd.s32 %v246, %v244
        %v249 = vadd.s32 %v246, %v245
        %v250 = vld [vmem:[%s185] sm:$0xff]
        %v251 = vld [vmem:[%s185 + $0x8] sm:$0xff]
        %v252 = vld [vmem:[%s185 + $0x10] sm:$0xff]
        %v253 = vld [vmem:[%s185 + $0x18] sm:$0xff]
        %v254 = vld [vmem:[%s185 + $0x20] sm:$0xff]
        %v255 = vld [vmem:[%s185 + $0x28] sm:$0xff]
        %v256 = vld [vmem:[%s185 + $0x30] sm:$0xff]
        %v257 = vld [vmem:[%s185 + $0x38] sm:$0xff]
        %v258 = vld [vmem:[%s185 + $0x40] sm:$0xff]
        %v259 = vld [vmem:[%s185 + $0x48] sm:$0xff]
        %v260 = vld [vmem:[%s185 + $0x50] sm:$0xff]
        %v261 = vld [vmem:[%s185 + $0x58] sm:$0xff]
        %262 = vset.pattern.permute.xlu0 0
        %263 = vperm.xlu0 %262, %v230
        %v264 = vpop.permute.xlu0 %263
        %265 = vset.pattern.permute.xlu0 0
        %266 = vperm.xlu0 %265, %v231
        %v267 = vpop.permute.xlu0 %266
        %268 = vset.pattern.permute.xlu0 0
        %269 = vperm.xlu0 %268, %v232
        %v270 = vpop.permute.xlu0 %269
        %vm271 = vcmp.eq.s32.totalorder %v264, 1
        %vm272 = vcmp.eq.s32.totalorder %v267, 1
        %vm273 = vcmp.eq.s32.totalorder %v270, 1
        %v274 = vsel %vm271, %v250, 0.0
        %v275 = vsel %vm271, %v251, 0.0
        %v276 = vsel %vm271, %v252, 0.0
        %v277 = vsel %vm271, %v253, 0.0
        %v278 = vsel %vm272, %v254, 0.0
        %v279 = vsel %vm272, %v255, 0.0
        %v280 = vsel %vm272, %v256, 0.0
        %v281 = vsel %vm272, %v257, 0.0
        %v282 = vsel %vm273, %v258, 0.0
        %v283 = vsel %vm273, %v259, 0.0
        %v284 = vsel %vm273, %v260, 0.0
        %v285 = vsel %vm273, %v261, 0.0
        %v286 = vmax.f32 %v274, %v276
        %v287 = vmax.f32 %v275, %v277
        %v288 = vmax.f32 %v286, %v287
        %289 = vmax.xlane.f32.xlu0 %v288
        %v290 = vpop.xlane.xlu0 %289
        %v291 = vmax.f32 %v278, %v280
        %v292 = vmax.f32 %v279, %v281
        %v293 = vmax.f32 %v291, %v292
        %294 = vmax.xlane.f32.xlu0 %v293
        %v295 = vpop.xlane.xlu0 %294
        %v296 = vmax.f32 %v282, %v284
        %v297 = vmax.f32 %v283, %v285
        %v298 = vmax.f32 %v296, %v297
        %299 = vmax.xlane.f32.xlu0 %v298
        %v300 = vpop.xlane.xlu0 %299
        %v301 = vsub.f32 %v274, %v290
        %v302 = vsub.f32 %v275, %v290
        %v303 = vsub.f32 %v276, %v290
        %v304 = vsub.f32 %v277, %v290
        %v305 = vsub.f32 %v278, %v295
        %v306 = vsub.f32 %v279, %v295
        %v307 = vsub.f32 %v280, %v295
        %v308 = vsub.f32 %v281, %v295
        %v309 = vsub.f32 %v282, %v300
        %v310 = vsub.f32 %v283, %v300
        %v311 = vsub.f32 %v284, %v300
        %v312 = vsub.f32 %v285, %v300
        %v313 = vmul.f32 %v301, 1.442695
        %v314 = vpow.pop %v313
        %v315 = vmul.f32 %v302, 1.442695
        %v316 = vpow.pop %v315
        %v317 = vmul.f32 %v303, 1.442695
        %v318 = vpow.pop %v317
        %v319 = vmul.f32 %v304, 1.442695
        %v320 = vpow.pop %v319
        %v321 = vmul.f32 %v305, 1.442695
        %v322 = vpow.pop %v321
        %v323 = vmul.f32 %v306, 1.442695
        %v324 = vpow.pop %v323
        %v325 = vmul.f32 %v307, 1.442695
        %v326 = vpow.pop %v325
        %v327 = vmul.f32 %v308, 1.442695
        %v328 = vpow.pop %v327
        %v329 = vmul.f32 %v309, 1.442695
        %v330 = vpow.pop %v329
        %v331 = vmul.f32 %v310, 1.442695
        %v332 = vpow.pop %v331
        %v333 = vmul.f32 %v311, 1.442695
        %v334 = vpow.pop %v333
        %v335 = vmul.f32 %v312, 1.442695
        %v336 = vpow.pop %v335
        %v337 = vadd.f32 %v314, %v316
        %v338 = vadd.f32 %v337, %v318
        %v339 = vadd.f32 %v338, %v320
        %340 = vadd.xlane.f32.xlu0 %v339
        %v341 = vpop.xlane.xlu0 %340
        %v342 = vadd.f32 %v322, %v324
        %v343 = vadd.f32 %v342, %v326
        %v344 = vadd.f32 %v343, %v328
        %345 = vadd.xlane.f32.xlu0 %v344
        %v346 = vpop.xlane.xlu0 %345
        %v347 = vadd.f32 %v330, %v332
        %v348 = vadd.f32 %v347, %v334
        %v349 = vadd.f32 %v348, %v336
        %350 = vadd.xlane.f32.xlu0 %v349
        %v351 = vpop.xlane.xlu0 %350
        %v352 = vlog2.pop %v341
        %v353 = vmul.f32 %v352, 0.6931472
        %v354 = vlog2.pop %v346
        %v355 = vmul.f32 %v354, 0.6931472
        %v356 = vlog2.pop %v351
        %v357 = vmul.f32 %v356, 0.6931472
        %358 = vset.pattern.permute.xlu0 0
        %359 = vperm.xlu0 %358, %v224
        %v360 = vpop.permute.xlu0 %359
        %361 = vset.pattern.permute.xlu0 0
        %362 = vperm.xlu0 %361, %v225
        %v363 = vpop.permute.xlu0 %362
        %364 = vset.pattern.permute.xlu0 0
        %365 = vperm.xlu0 %364, %v226
        %v366 = vpop.permute.xlu0 %365
        %vm367 = vcmp.eq.s32.totalorder %v237, %v360
        %vm368 = vcmp.eq.s32.totalorder %v238, %v360
        %vm369 = vcmp.eq.s32.totalorder %v239, %v360
        %vm370 = vcmp.eq.s32.totalorder %v240, %v360
        %vm371 = vcmp.eq.s32.totalorder %v237, %v363
        %vm372 = vcmp.eq.s32.totalorder %v238, %v363
        %vm373 = vcmp.eq.s32.totalorder %v239, %v363
        %vm374 = vcmp.eq.s32.totalorder %v240, %v363
        %vm375 = vcmp.eq.s32.totalorder %v237, %v366
        %vm376 = vcmp.eq.s32.totalorder %v238, %v366
        %vm377 = vcmp.eq.s32.totalorder %v239, %v366
        %vm378 = vcmp.eq.s32.totalorder %v240, %v366
        %v379 = vadd.f32 %v301, %v302
        %v380 = vadd.f32 %v379, %v303
        %v381 = vadd.f32 %v380, %v304
        %382 = vadd.xlane.f32.xlu0 %v381
        %v383 = vpop.xlane.xlu0 %382
        %v384 = vadd.f32 %v305, %v306
        %v385 = vadd.f32 %v384, %v307
        %v386 = vadd.f32 %v385, %v308
        %387 = vadd.xlane.f32.xlu0 %v386
        %v388 = vpop.xlane.xlu0 %387
        %v389 = vadd.f32 %v309, %v310
        %v390 = vadd.f32 %v389, %v311
        %v391 = vadd.f32 %v390, %v312
        %392 = vadd.xlane.f32.xlu0 %v391
        %v393 = vpop.xlane.xlu0 %392
        %v394 = vsel %vm367, %v301, 0.0
        %v395 = vsel %vm368, %v302, 0.0
        %v396 = vsel %vm369, %v303, 0.0
        %v397 = vsel %vm370, %v304, 0.0
        %v398 = vsel %vm371, %v305, 0.0
        %v399 = vsel %vm372, %v306, 0.0
        %v400 = vsel %vm373, %v307, 0.0
        %v401 = vsel %vm374, %v308, 0.0
        %v402 = vsel %vm375, %v309, 0.0
        %v403 = vsel %vm376, %v310, 0.0
        %v404 = vsel %vm377, %v311, 0.0
        %v405 = vsel %vm378, %v312, 0.0
        %v406 = vadd.f32 %v394, %v395
        %v407 = vadd.f32 %v406, %v396
        %v408 = vadd.f32 %v407, %v397
        %409 = vadd.xlane.f32.xlu0 %v408
        %v410 = vpop.xlane.xlu0 %409
        %v411 = vadd.f32 %v398, %v399
        %v412 = vadd.f32 %v411, %v400
        %v413 = vadd.f32 %v412, %v401
        %414 = vadd.xlane.f32.xlu0 %v413
        %v415 = vpop.xlane.xlu0 %414
        %v416 = vadd.f32 %v402, %v403
        %v417 = vadd.f32 %v416, %v404
        %v418 = vadd.f32 %v417, %v405
        %419 = vadd.xlane.f32.xlu0 %v418
        %v420 = vpop.xlane.xlu0 %419
        %v421 = vmul.f32 %v353, 512.0
        %v422 = vmul.f32 %v355, 512.0
        %v423 = vmul.f32 %v357, 512.0
        %v424 = vsub.f32 %v383, %v421
        %v425 = vsub.f32 %v388, %v422
        %v426 = vsub.f32 %v393, %v423
        %v427 = vsub.f32 %v410, %v353
        %v428 = vsub.f32 %v415, %v355
        %v429 = vsub.f32 %v420, %v357
        %v430 = vmul.f32 %v424, 0.00019569472
        %v431 = vmul.f32 %v425, 0.00019569472
        %v432 = vmul.f32 %v426, 0.00019569472
        %v433 = vsub.f32 -0.9487199, %v430
        %v434 = vsub.f32 -0.9487199, %v431
        %v435 = vsub.f32 -0.9487199, %v432
        %v436 = vmul.f32 %v427, 0.8998043
        %v437 = vmul.f32 %v428, 0.8998043
        %v438 = vmul.f32 %v429, 0.8998043
        %v439 = vsub.f32 %v433, %v436
        %v440 = vsub.f32 %v434, %v437
        %v441 = vsub.f32 %v435, %v438
        %v442 = vmul.f32 %v439, %v233
        %v443 = vmul.f32 %v440, %v234
        %v444 = vmul.f32 %v441, %v235
        %vm445 = vcmask 7168
        %v446 = vsel %vm445, %v442, 0.0
        %v447 = vsel %vm445, %v443, 0.0
        %v448 = vadd.f32 %v446, %v447
        %v449 = vsel %vm445, %v444, 0.0
        %v450 = vadd.f32 %v448, %v449
        %451 = vadd.xlane.f32.xlu0 %v450
        %v452 = vpop.xlane.xlu0 %451
        %v453 = vrot.slane %v452, 4
        %v454 = vadd.f32 %v452, %v453
        %v455 = vrot.slane %v454, 2
        %v456 = vadd.f32 %v454, %v455
        %v457 = vrot.slane %v456, 1
        %v458 = vadd.f32 %v456, %v457
        %s459 = vtos %v458
        %v460 = vld [vmem:[%s2] sm:$0xf]
        %v461 = vlaneseq
        %v462 = vshrl.u32 %v461, 7
        %v463 = vsub.s32 0, %v462
        %v464 = vrot.slane %v460, %v463
        %v465 = vlaneseq
        %v466 = vshrl.u32 %v465, 7
        %v467 = vsub.s32 1, %v466
        %v468 = vrot.slane %v460, %v467
        %v469 = vlaneseq
        %v470 = vshrl.u32 %v469, 7
        %v471 = vsub.s32 2, %v470
        %v472 = vrot.slane %v460, %v471
        %v473 = vlaneseq
        %v474 = vshrl.u32 %v473, 7
        %v475 = vsub.s32 3, %v474
        %v476 = vrot.slane %v460, %v475
        %vm477 = vcmp.lt.s32.totalorder %v464, %v247
        %vm478 = vcmp.lt.s32.totalorder %v468, %v247
        %vm479 = vcmp.lt.s32.totalorder %v472, %v247
        %vm480 = vcmp.lt.s32.totalorder %v476, %v247
        %vm481 = vcmp.lt.s32.totalorder %v464, %v248
        %vm482 = vcmp.lt.s32.totalorder %v468, %v248
        %vm483 = vcmp.lt.s32.totalorder %v472, %v248
        %vm484 = vcmp.lt.s32.totalorder %v476, %v248
        %vm485 = vcmp.lt.s32.totalorder %v464, %v249
        %vm486 = vcmp.lt.s32.totalorder %v468, %v249
        %vm487 = vcmp.lt.s32.totalorder %v472, %v249
        %vm488 = vcmp.lt.s32.totalorder %v476, %v249
        %vm489 = vmxor %vm367, 1
        %vm490 = vmxor %vm368, 1
        %vm491 = vmxor %vm369, 1
        %vm492 = vmxor %vm370, 1
        %vm493 = vmxor %vm371, 1
        %vm494 = vmxor %vm372, 1
        %vm495 = vmxor %vm373, 1
        %vm496 = vmxor %vm374, 1
        %vm497 = vmxor %vm375, 1
        %vm498 = vmxor %vm376, 1
        %vm499 = vmxor %vm377, 1
        %vm500 = vmxor %vm378, 1
        %vm501 = vmand %vm477, %vm489
        %vm502 = vmand %vm478, %vm490
        %vm503 = vmand %vm479, %vm491
        %vm504 = vmand %vm480, %vm492
        %vm505 = vmand %vm481, %vm493
        %vm506 = vmand %vm482, %vm494
        %vm507 = vmand %vm483, %vm495
        %vm508 = vmand %vm484, %vm496
        %vm509 = vmand %vm485, %vm497
        %vm510 = vmand %vm486, %vm498
        %vm511 = vmand %vm487, %vm499
        %vm512 = vmand %vm488, %vm500
        %vm513 = vmand %vm501, %vm271
        %vm514 = vmand %vm502, %vm271
        %vm515 = vmand %vm503, %vm271
        %vm516 = vmand %vm504, %vm271
        %vm517 = vmand %vm505, %vm272
        %vm518 = vmand %vm506, %vm272
        %vm519 = vmand %vm507, %vm272
        %vm520 = vmand %vm508, %vm272
        %vm521 = vmand %vm509, %vm273
        %vm522 = vmand %vm510, %vm273
        %vm523 = vmand %vm511, %vm273
        %vm524 = vmand %vm512, %vm273
        %v525 = vsel %vm513, 1, 0
        %v526 = vsel %vm514, 1, 0
        %v527 = vsel %vm515, 1, 0
        %v528 = vsel %vm516, 1, 0
        %v529 = vsel %vm517, 1, 0
        %v530 = vsel %vm518, 1, 0
        %v531 = vsel %vm519, 1, 0
        %v532 = vsel %vm520, 1, 0
        %v533 = vsel %vm521, 1, 0
        %v534 = vsel %vm522, 1, 0
        %v535 = vsel %vm523, 1, 0
        %v536 = vsel %vm524, 1, 0
        %v537 = vcvt.s32.f32 %v525
        %v538 = vcvt.s32.f32 %v526
        %v539 = vcvt.s32.f32 %v527
        %v540 = vcvt.s32.f32 %v528
        %v541 = vcvt.s32.f32 %v529
        %v542 = vcvt.s32.f32 %v530
        %v543 = vcvt.s32.f32 %v531
        %v544 = vcvt.s32.f32 %v532
        %v545 = vcvt.s32.f32 %v533
        %v546 = vcvt.s32.f32 %v534
        %v547 = vcvt.s32.f32 %v535
        %v548 = vcvt.s32.f32 %v536
        %v549 = vrcp.pop %v341
        %v550 = vmul.f32 1.0, %v549
        %v551 = vrcp.pop %v346
        %v552 = vmul.f32 1.0, %v551
        %v553 = vrcp.pop %v351
        %v554 = vmul.f32 1.0, %v553
        %v555 = vmul.f32 %v314, %v550
        %v556 = vmul.f32 %v316, %v550
        %v557 = vmul.f32 %v318, %v550
        %v558 = vmul.f32 %v320, %v550
        %v559 = vmul.f32 %v322, %v552
        %v560 = vmul.f32 %v324, %v552
        %v561 = vmul.f32 %v326, %v552
        %v562 = vmul.f32 %v328, %v552
        %v563 = vmul.f32 %v330, %v554
        %v564 = vmul.f32 %v332, %v554
        %v565 = vmul.f32 %v334, %v554
        %v566 = vmul.f32 %v336, %v554
        %v567 = vsub.f32 1.0, %v555
        %v568 = vsub.f32 1.0, %v556
        %v569 = vsub.f32 1.0, %v557
        %v570 = vsub.f32 1.0, %v558
        %v571 = vsub.f32 1.0, %v559
        %v572 = vsub.f32 1.0, %v560
        %v573 = vsub.f32 1.0, %v561
        %v574 = vsub.f32 1.0, %v562
        %v575 = vsub.f32 1.0, %v563
        %v576 = vsub.f32 1.0, %v564
        %v577 = vsub.f32 1.0, %v565
        %v578 = vsub.f32 1.0, %v566
        %v579 = vmax.f32 %v567, 1e-05
        %v580 = vmax.f32 %v568, 1e-05
        %v581 = vmax.f32 %v569, 1e-05
        %v582 = vmax.f32 %v570, 1e-05
        %v583 = vmax.f32 %v571, 1e-05
        %v584 = vmax.f32 %v572, 1e-05
        %v585 = vmax.f32 %v573, 1e-05
        %v586 = vmax.f32 %v574, 1e-05
        %v587 = vmax.f32 %v575, 1e-05
        %v588 = vmax.f32 %v576, 1e-05
        %v589 = vmax.f32 %v577, 1e-05
        %v590 = vmax.f32 %v578, 1e-05
        %v591 = vlog2.pop %v579
        %v592 = vmul.f32 %v591, 0.6931472
        %v593 = vlog2.pop %v580
        %v594 = vmul.f32 %v593, 0.6931472
        %v595 = vlog2.pop %v581
        %v596 = vmul.f32 %v595, 0.6931472
        %v597 = vlog2.pop %v582
        %v598 = vmul.f32 %v597, 0.6931472
        %v599 = vlog2.pop %v583
        %v600 = vmul.f32 %v599, 0.6931472
        %v601 = vlog2.pop %v584
        %v602 = vmul.f32 %v601, 0.6931472
        %v603 = vlog2.pop %v585
        %v604 = vmul.f32 %v603, 0.6931472
        %v605 = vlog2.pop %v586
        %v606 = vmul.f32 %v605, 0.6931472
        %v607 = vlog2.pop %v587
        %v608 = vmul.f32 %v607, 0.6931472
        %v609 = vlog2.pop %v588
        %v610 = vmul.f32 %v609, 0.6931472
        %v611 = vlog2.pop %v589
        %v612 = vmul.f32 %v611, 0.6931472
        %v613 = vlog2.pop %v590
        %v614 = vmul.f32 %v613, 0.6931472
        %v615 = vmul.f32 %v592, %v537
        %v616 = vmul.f32 %v594, %v538
        %v617 = vmul.f32 %v596, %v539
        %v618 = vmul.f32 %v598, %v540
        %v619 = vmul.f32 %v600, %v541
        %v620 = vmul.f32 %v602, %v542
        %v621 = vmul.f32 %v604, %v543
        %v622 = vmul.f32 %v606, %v544
        %v623 = vmul.f32 %v608, %v545
        %v624 = vmul.f32 %v610, %v546
        %v625 = vmul.f32 %v612, %v547
        %v626 = vmul.f32 %v614, %v548
        %v627 = vadd.f32 %v615, %v616
        %v628 = vadd.f32 %v627, %v617
        %v629 = vadd.f32 %v628, %v618
        %v630 = vadd.f32 %v629, %v619
        %v631 = vadd.f32 %v630, %v620
        %v632 = vadd.f32 %v631, %v621
        %v633 = vadd.f32 %v632, %v622
        %v634 = vadd.f32 %v633, %v623
        %v635 = vadd.f32 %v634, %v624
        %v636 = vadd.f32 %v635, %v625
        %v637 = vadd.f32 %v636, %v626
        %638 = vadd.xlane.f32.xlu0 %v637
        %v639 = vpop.xlane.xlu0 %638
        %v640 = vrot.slane %v639, 4
        %v641 = vadd.f32 %v639, %v640
        %v642 = vrot.slane %v641, 2
        %v643 = vadd.f32 %v641, %v642
        %v644 = vrot.slane %v643, 1
        %v645 = vadd.f32 %v643, %v644
        %s646 = vtos %v645
        %s647 = ssub.f32 0.0, %s646
        %vm648 = vcmp.eq.s32.totalorder %v237, 0
        %v649 = vstv %s459
        %v650 = vstv %s647
        %v651 = vsel %vm648, %v649, %v650
        %vm652 = vcmask 8192
        %653 = vst.msk [vmem:[%s211] sm:$0x1] %vm652, %v651
        %s654 = sand.u32 %s101, 1
        %s655 = scalar_lea.sflag [#allocation4], %s654
        %s656 = sand.u32 %s101, 1
        %s657 = scalar_lea.vmem [#allocation5], %s656
        // Predicated region
        $region37: #{tpu_custom_call.1} parent=31 // pred_check
          %p658 = pneg %p111
        $region38: #{tpu_custom_call.1} parent=31 // pred_check_branch
          %660 = sbr.rel (%p658) target = $region40
        $region39: #{tpu_custom_call.1} parent=31 // pred_region
          %s662 = ssub.s32 16, 16
          %663 = vsyncadd %s655, %s662
          %s664 = smul.addr %s20, 16
          %s665 = scalar_lea.hbm %s3, %s664
          %s667 = sshll.u32 %s657, 4
          %s668 = int_to_ptr.vmem [resolvable:$true] %s667
          %670 = dma.vmem_to_hbm [thread:$0]  %s668, 16, %s665, %s655
        $region40: #{tpu_custom_call.1} parent=31 // pred_fallthru
          _
      $region32: #{tpu_custom_call.1} parent=5 // pred_fallthru
        _
      %p671 = scmp.le.s32.totalorder 2, %s15
      // Predicated region
      $region41: #{tpu_custom_call.1} parent=5 // pred_check
        %p672 = pneg %p671
      $region42: #{tpu_custom_call.1} parent=5 // pred_check_branch
        %674 = sbr.rel (%p672) target = $region44
      $region43: #{tpu_custom_call.1} parent=5 // pred_region
        %s675 = ssub.s32 %s15, 2
        // Predicated region
        $region45: #{tpu_custom_call.1} parent=43 // pred_check
          %p676 = pneg %p117
        $region46: #{tpu_custom_call.1} parent=43 // pred_check_branch
          %678 = sbr.rel (%p676) target = $region48
        $region47: #{tpu_custom_call.1} parent=43 // pred_region
          %s679 = sand.u32 %s102, 1
          %s680 = scalar_lea.sflag [#allocation4], %s679
          %s681 = sand.u32 %s102, 1
          %s682 = scalar_lea.vmem [#allocation5], %s681
          %683 = dma.done %s680, 16
        $region48: #{tpu_custom_call.1} parent=43 // pred_fallthru
          _
      $region44: #{tpu_custom_call.1} parent=5 // pred_fallthru
        _
    $region6: #{tpu_custom_call.1} parent=1 // loop_footer
      %s19 = sadd.s32 1, %s15
    $region7: #{tpu_custom_call.1} parent=1 // loop_footer_branch
      %14 = sbr.rel target = $region3
    $region8: #{tpu_custom_call.1} parent=1 // loop_exit
      _
    %684 = vsyncpa [#allocation3], 1
    %s685 = scalar_lea.sflag [#allocation3], 1
    %686 = vsyncpa %s685, 1
    %687 = vsyncpa [#allocation4], 1
    %s688 = scalar_lea.sflag [#allocation4], 1
    %689 = vsyncpa %s688, 1

</llo_original>
